<compile_context>
chip_gen: v7x
topology: tpu7x:2x2x1
jax: 0.10.0
libtpu: 0.0.40
codegen_flags: <defaults>
</compile_context>

<pallas_src>
import jax
import jax.numpy as jnp
from jax.experimental import pallas as pl
from jax.experimental.pallas import tpu as pltpu


def odefunc_kernel(yt_ref, w1t_ref, b1_ref, w2_ref, b2_ref, o_ref):
    # yt_ref: [2, TILE_B]   w1t_ref: [50, 2]   b1_ref: [50, 1]
    # w2_ref: [50, 1]       b2_ref:  [1, 1]    o_ref:  [2, TILE_B]
    y0 = yt_ref[0:1, :]                                   # [1, TILE_B]
    y1 = yt_ref[1:2, :]                                   # [1, TILE_B]

    # Layer 1 (in_features=2): pure VPU broadcast-multiply-add; tanh runs
    # lane-dense on [50, TILE_B] (EUP is the saturating unit).
    h = jnp.tanh(w1t_ref[:, 0:1] * y0 + w1t_ref[:, 1:2] * y1 + b1_ref[...])

    # Layer 2 (out_features=1): elementwise multiply + sublane reduce (XLU),
    # no MXU involvement.
    b_row = jnp.sum(h * w2_ref[...], axis=0, keepdims=True) + b2_ref[...]

    # Direct row stores instead of concatenate: full-lane, unmasked.
    o_ref[0:1, :] = y1
    o_ref[1:2, :] = b_row.astype(o_ref.dtype)


def ode_func(t, y, w1t, b1c, w2c, b2, *, tile_b=2048):
    """Pallas equivalent of ODEFunc.forward(t, y). `t` is unused (as in PyTorch)."""
    del t
    B = y.shape[0]
    hidden = w1t.shape[0]

    # Batch tile on lanes: multiple of 128, capped at tile_b (VMEM-safe on v7x).
    tile = min(tile_b, max(128, ((B + 127) // 128) * 128))
    b_pad = pl.cdiv(B, tile) * tile

    # Transposed, zero-padded input: [2, B_pad] (padding rows are sliced off below).
    yt = jnp.zeros((2, b_pad), jnp.float32).at[:, :B].set(y.T.astype(jnp.float32))

    cost = pl.CostEstimate(
        flops=int(302 * b_pad),                 # ~ (2*2*50 + 2*50) MACs per row
        transcendentals=int(hidden * b_pad),    # 50 tanh per row
        bytes_accessed=int(16 * b_pad) + 4 * (2 * hidden + 2 * hidden + 1),
    )

    out_t = pl.pallas_call(
        odefunc_kernel,
        out_shape=jax.ShapeDtypeStruct((2, b_pad), jnp.float32),
        grid=(b_pad // tile,),
        in_specs=[
            pl.BlockSpec((2, tile), lambda i: (0, i)),        # yT tile
            pl.BlockSpec((hidden, 2), lambda i: (0, 0)),      # w1t (VMEM-resident)
            pl.BlockSpec((hidden, 1), lambda i: (0, 0)),      # b1
            pl.BlockSpec((hidden, 1), lambda i: (0, 0)),      # w2 (transposed)
            pl.BlockSpec((1, 1), lambda i: (0, 0)),           # b2
        ],
        out_specs=pl.BlockSpec((2, tile), lambda i: (0, i)),
        compiler_params=pltpu.CompilerParams(
            dimension_semantics=("parallel",),                # megacore on v7x
        ),
        cost_estimate=cost,
    )(yt, w1t, b1c, w2c, b2)

    # Back to the PyTorch layout [B, 2], dropping padded columns.
    return out_t[:, :B].T


def init_params(key):
    # nn.init.normal_(weight, mean=0, std=0.1); bias = 0
    k1, k2 = jax.random.split(key)
    w1t = 0.1 * jax.random.normal(k1, (50, 2), dtype=jnp.float32)   # Linear(2, 50).weight
    b1c = jnp.zeros((50, 1), dtype=jnp.float32)
    w2c = 0.1 * jax.random.normal(k2, (50, 1), dtype=jnp.float32)   # Linear(50, 1).weight.T
    b2 = jnp.zeros((1, 1), dtype=jnp.float32)
    return w1t, b1c, w2c, b2


if __name__ == "__main__":
    key = jax.random.PRNGKey(0)
    k_params, k_y = jax.random.split(key)
    w1t, b1c, w2c, b2 = init_params(k_params)

    # NOTE: at B=8 the pallas_call is pure launch overhead -- in a real ODE
    # solver, batch many trajectories / RK stages per call (or use plain jnp).
    B = 8
    y = jax.random.normal(k_y, (B, 2), dtype=jnp.float32)
    t = jnp.float32(0.0)

    out = jax.block_until_ready(ode_func(t, y, w1t, b1c, w2c, b2))

    # Pure-JAX reference (matches the PyTorch module exactly).
    h_ref = jnp.tanh(y @ w1t.T + b1c[:, 0])
    ref = jnp.concatenate([y[:, 1:2], h_ref @ w2c + b2[0]], axis=-1)

    assert out.shape == (B, 2)
    assert jnp.allclose(out, ref, atol=1e-5, rtol=1e-5)

    print("KERNEL_OK")
</pallas_src>

<mosaic_0001>
module attributes {stable_mosaic.version = 11 : i64} {
  func.func @odefunc_kernel(%arg0: i32, %arg1: memref<2x128xf32, #tpu.memory_space<vmem>>, %arg2: memref<50x2xf32, #tpu.memory_space<vmem>>, %arg3: memref<50x1xf32, #tpu.memory_space<vmem>>, %arg4: memref<50x1xf32, #tpu.memory_space<vmem>>, %arg5: memref<1x1xf32, #tpu.memory_space<vmem>>, %arg6: memref<2x128xf32, #tpu.memory_space<vmem>>) attributes {dimension_semantics = [#tpu.dimension_semantics<parallel>], iteration_bounds = array<i64: 1>, scalar_prefetch = 0 : i64, scratch_operands = 0 : i64, tpu.core_type = #tpu.core_type<tc>, window_params = [{transform_indices = @transform_0, window_bounds = array<i64: 2, 128>}, {pipeline_mode = #tpu.pipeline_mode<synchronous>, transform_indices = @transform_1, window_bounds = array<i64: 50, 2>}, {pipeline_mode = #tpu.pipeline_mode<synchronous>, transform_indices = @transform_2, window_bounds = array<i64: 50, 1>}, {pipeline_mode = #tpu.pipeline_mode<synchronous>, transform_indices = @transform_3, window_bounds = array<i64: 50, 1>}, {pipeline_mode = #tpu.pipeline_mode<synchronous>, transform_indices = @transform_4, window_bounds = array<i64: 1, 1>}, {transform_indices = @transform_5, window_bounds = array<i64: 2, 128>}]} {
    %c0 = arith.constant 0 : index
    %c0_0 = arith.constant 0 : index
    %0 = vector.load %arg1[%c0, %c0_0] : memref<2x128xf32, #tpu.memory_space<vmem>>, vector<1x128xf32>
    %c1 = arith.constant 1 : index
    %c0_1 = arith.constant 0 : index
    %1 = vector.load %arg1[%c1, %c0_1] : memref<2x128xf32, #tpu.memory_space<vmem>>, vector<1x128xf32>
    %c0_2 = arith.constant 0 : index
    %c0_3 = arith.constant 0 : index
    %2 = vector.load %arg2[%c0_2, %c0_3] : memref<50x2xf32, #tpu.memory_space<vmem>>, vector<50x1xf32>
    %3 = vector.broadcast %2 : vector<50x1xf32> to vector<50x128xf32>
    %4 = vector.broadcast %0 : vector<1x128xf32> to vector<50x128xf32>
    %5 = arith.mulf %3, %4 : vector<50x128xf32>
    %c0_4 = arith.constant 0 : index
    %c1_5 = arith.constant 1 : index
    %6 = vector.load %arg2[%c0_4, %c1_5] : memref<50x2xf32, #tpu.memory_space<vmem>>, vector<50x1xf32>
    %7 = vector.broadcast %6 : vector<50x1xf32> to vector<50x128xf32>
    %8 = vector.broadcast %1 : vector<1x128xf32> to vector<50x128xf32>
    %9 = arith.mulf %7, %8 : vector<50x128xf32>
    %10 = arith.addf %5, %9 : vector<50x128xf32>
    %c0_6 = arith.constant 0 : index
    %c0_7 = arith.constant 0 : index
    %11 = vector.load %arg3[%c0_6, %c0_7] : memref<50x1xf32, #tpu.memory_space<vmem>>, vector<50x1xf32>
    %12 = vector.broadcast %11 : vector<50x1xf32> to vector<50x128xf32>
    %13 = arith.addf %10, %12 : vector<50x128xf32>
    %14 = math.tanh %13 : vector<50x128xf32>
    %c0_8 = arith.constant 0 : index
    %c0_9 = arith.constant 0 : index
    %15 = vector.load %arg4[%c0_8, %c0_9] : memref<50x1xf32, #tpu.memory_space<vmem>>, vector<50x1xf32>
    %16 = vector.broadcast %15 : vector<50x1xf32> to vector<50x128xf32>
    %17 = arith.mulf %14, %16 : vector<50x128xf32>
    %cst = arith.constant dense<0.000000e+00> : vector<128xf32>
    %18 = vector.multi_reduction <add>, %17, %cst [0] : vector<50x128xf32> to vector<128xf32>
    %19 = vector.shape_cast %18 : vector<128xf32> to vector<1x128xf32>
    %c0_10 = arith.constant 0 : index
    %c0_11 = arith.constant 0 : index
    %20 = vector.load %arg5[%c0_10, %c0_11] : memref<1x1xf32, #tpu.memory_space<vmem>>, vector<1x1xf32>
    %21 = vector.broadcast %20 : vector<1x1xf32> to vector<1x128xf32>
    %22 = arith.addf %19, %21 : vector<1x128xf32>
    %c0_12 = arith.constant 0 : index
    %c0_13 = arith.constant 0 : index
    %23 = vector.load %arg6[%c0_12, %c0_13] : memref<2x128xf32, #tpu.memory_space<vmem>>, vector<1x128xf32>
    tpu.vector_store %arg6[%c0_12, %c0_13], %1 {strides = array<i32>} : memref<2x128xf32, #tpu.memory_space<vmem>>, vector<1x128xf32>,
    %c1_14 = arith.constant 1 : index
    %c0_15 = arith.constant 0 : index
    %24 = vector.load %arg6[%c1_14, %c0_15] : memref<2x128xf32, #tpu.memory_space<vmem>>, vector<1x128xf32>
    tpu.vector_store %arg6[%c1_14, %c0_15], %22 {strides = array<i32>} : memref<2x128xf32, #tpu.memory_space<vmem>>, vector<1x128xf32>,
    return
  }
  func.func @transform_0(%arg0: i32) -> (i32, i32) {
    %c0_i32 = arith.constant 0 : i32
    %c0_i32_0 = arith.constant 0 : i32
    return %c0_i32, %arg0 : i32, i32
  }
  func.func @transform_1(%arg0: i32) -> (i32, i32) {
    %c0_i32 = arith.constant 0 : i32
    %c0_i32_0 = arith.constant 0 : i32
    %c0_i32_1 = arith.constant 0 : i32
    return %c0_i32, %c0_i32_0 : i32, i32
  }
  func.func @transform_2(%arg0: i32) -> (i32, i32) {
    %c0_i32 = arith.constant 0 : i32
    %c0_i32_0 = arith.constant 0 : i32
    %c0_i32_1 = arith.constant 0 : i32
    return %c0_i32, %c0_i32_0 : i32, i32
  }
  func.func @transform_3(%arg0: i32) -> (i32, i32) {
    %c0_i32 = arith.constant 0 : i32
    %c0_i32_0 = arith.constant 0 : i32
    %c0_i32_1 = arith.constant 0 : i32
    return %c0_i32, %c0_i32_0 : i32, i32
  }
  func.func @transform_4(%arg0: i32) -> (i32, i32) {
    %c0_i32 = arith.constant 0 : i32
    %c0_i32_0 = arith.constant 0 : i32
    %c0_i32_1 = arith.constant 0 : i32
    return %c0_i32, %c0_i32_0 : i32, i32
  }
  func.func @transform_5(%arg0: i32) -> (i32, i32) {
    %c0_i32 = arith.constant 0 : i32
    %c0_i32_0 = arith.constant 0 : i32
    return %c0_i32, %arg0 : i32, i32
  }
}

</mosaic_0001>

<llo_original>
// kernel: tpu_custom_call.1
$region0: #{tpu_custom_call.1}
  #allocation0 [shape = 'u32[]', space=smem, size = 0x4, offset = 0x4, fixed_abs, tag = 'smem constant byte address 0x4 - core index']
  #allocation1 [shape = 'u32[144,128]{1,0:T(1,128)}', space=vmem, size = 0x12000, scoped, tag = 'internal scratch']
  #allocation2 [shape = 'f32[1,1]{1,0:T(1,128)S(1)}', space=vmem, size = 0x200, scoped, tag = 'scoped memory for tpu_custom_call.1']
  %s0 = inlined_call_operand.vmem [shape: f32[2,128], index: 0, kind: input, shape index: {}]
  %s1 = inlined_call_operand.vmem [shape: f32[50,2], index: 1, kind: input, shape index: {}]
  %s2 = inlined_call_operand.vmem [shape: f32[50,1], index: 2, kind: input, shape index: {}]
  %s3 = inlined_call_operand.vmem [shape: f32[50,1], index: 3, kind: input, shape index: {}]
  %s4 = inlined_call_operand.<no memory space> [shape: f32[1,1], index: 4, kind: input, shape index: {}]
  %s5 = inlined_call_operand.hbm [shape: f32[2,128], index: 5, kind: output, shape index: {}]
  %s6 = sld [smem:[#allocation0]]
  $region30: #{tpu_custom_call.1} parent=0
    _
  %s8 = ssub.s32 1, %s6
  %s9 = scalar_select 0, %s8, %s6
  %v10 = vstv %s4
  %11 = vst [vmem:[#allocation2] sm:$0x1] %v10
  $region1: #{tpu_custom_call.1} parent=0
    #allocation3 [shape = 'u8[1024]{0}', space=vmem, size = 0x400, scoped, tag = 'output window, operand 0, single buffered']
    #allocation4 [shape = 's32[1]{0}', space=sflag, size = 0x4, scoped, tag = 'scoped memory for tpu_custom_call.1']
    %12 = vsyncpa [#allocation4], 0
    // Predicated region
    $region2: #{tpu_custom_call.1} parent=1 // pred_check
      _
    $region3: #{tpu_custom_call.1} parent=1 // pred_check_branch
      %14 = sbr.rel (0) target = $region5
    $region4: #{tpu_custom_call.1} parent=1 // pred_region
      _
    $region5: #{tpu_custom_call.1} parent=1 // pred_fallthru
      _
    // Predicated region
    $region6: #{tpu_custom_call.1} parent=1 // pred_check
      _
    $region7: #{tpu_custom_call.1} parent=1 // pred_check_branch
      %16 = sbr.rel (0) target = $region9
    $region8: #{tpu_custom_call.1} parent=1 // pred_region
      _
    $region9: #{tpu_custom_call.1} parent=1 // pred_fallthru
      _
    // Predicated region
    $region10: #{tpu_custom_call.1} parent=1 // pred_check
      _
    $region11: #{tpu_custom_call.1} parent=1 // pred_check_branch
      %18 = sbr.rel (0) target = $region13
    $region12: #{tpu_custom_call.1} parent=1 // pred_region
      _
    $region13: #{tpu_custom_call.1} parent=1 // pred_fallthru
      _
    // Predicated region
    $region14: #{tpu_custom_call.1} parent=1 // pred_check
      _
    $region15: #{tpu_custom_call.1} parent=1 // pred_check_branch
      %20 = sbr.rel (0) target = $region17
    $region16: #{tpu_custom_call.1} parent=1 // pred_region
      _
    $region17: #{tpu_custom_call.1} parent=1 // pred_fallthru
      _
    // Predicated region
    $region18: #{tpu_custom_call.1} parent=1 // pred_check
      _
    $region19: #{tpu_custom_call.1} parent=1 // pred_check_branch
      %22 = sbr.rel (0) target = $region21
    $region20: #{tpu_custom_call.1} parent=1 // pred_region
      _
    $region21: #{tpu_custom_call.1} parent=1 // pred_fallthru
      _
    %v23 = vld [vmem:[%s0] sm:$0x1]
    %v24 = vld [vmem:[%s0 + $0x1] sm:$0x1]
    %v25 = vld [vmem:[%s1] sm:$0xff]
    %v26 = vld [vmem:[%s1 + $0x8] sm:$0xff]
    %v27 = vld [vmem:[%s1 + $0x10] sm:$0xff]
    %v28 = vld [vmem:[%s1 + $0x18] sm:$0xff]
    %v29 = vld [vmem:[%s1 + $0x20] sm:$0xff]
    %v30 = vld [vmem:[%s1 + $0x28] sm:$0xff]
    %v31 = vld [vmem:[%s1 + $0x30] sm:$0x3]
    %33 = vset.pattern.permute.xlu0 0
    %34 = vperm.xlu0 %33, %v25
    %v35 = vpop.permute.xlu0 %34
    %38 = vset.pattern.permute.xlu0 0
    %39 = vperm.xlu0 %38, %v26
    %v40 = vpop.permute.xlu0 %39
    %43 = vset.pattern.permute.xlu0 0
    %44 = vperm.xlu0 %43, %v27
    %v45 = vpop.permute.xlu0 %44
    %48 = vset.pattern.permute.xlu0 0
    %49 = vperm.xlu0 %48, %v28
    %v50 = vpop.permute.xlu0 %49
    %53 = vset.pattern.permute.xlu0 0
    %54 = vperm.xlu0 %53, %v29
    %v55 = vpop.permute.xlu0 %54
    %58 = vset.pattern.permute.xlu0 0
    %59 = vperm.xlu0 %58, %v30
    %v60 = vpop.permute.xlu0 %59
    %63 = vset.pattern.permute.xlu0 0
    %64 = vperm.xlu0 %63, %v31
    %v65 = vpop.permute.xlu0 %64
    %v67 = vlaneseq
    %v68 = vshrl.u32 %v67, 7
    %v69 = vsub.s32 0, %v68
    %v70 = vrot.slane %v23, %v69
    %v71 = vmul.f32 %v35, %v70
    %v72 = vmul.f32 %v40, %v70
    %v73 = vmul.f32 %v45, %v70
    %v74 = vmul.f32 %v50, %v70
    %v75 = vmul.f32 %v55, %v70
    %v76 = vmul.f32 %v60, %v70
    %v77 = vmul.f32 %v65, %v70
    %78 = vset.pattern.permute.xlu0 1
    %79 = vperm.xlu0 %78, %v25
    %v80 = vpop.permute.xlu0 %79
    %82 = vset.pattern.permute.xlu0 1
    %83 = vperm.xlu0 %82, %v26
    %v84 = vpop.permute.xlu0 %83
    %86 = vset.pattern.permute.xlu0 1
    %87 = vperm.xlu0 %86, %v27
    %v88 = vpop.permute.xlu0 %87
    %90 = vset.pattern.permute.xlu0 1
    %91 = vperm.xlu0 %90, %v28
    %v92 = vpop.permute.xlu0 %91
    %94 = vset.pattern.permute.xlu0 1
    %95 = vperm.xlu0 %94, %v29
    %v96 = vpop.permute.xlu0 %95
    %98 = vset.pattern.permute.xlu0 1
    %99 = vperm.xlu0 %98, %v30
    %v100 = vpop.permute.xlu0 %99
    %102 = vset.pattern.permute.xlu0 1
    %103 = vperm.xlu0 %102, %v31
    %v104 = vpop.permute.xlu0 %103
    %v106 = vlaneseq
    %v107 = vshrl.u32 %v106, 7
    %v108 = vsub.s32 0, %v107
    %v109 = vrot.slane %v24, %v108
    %v110 = vmul.f32 %v80, %v109
    %v111 = vmul.f32 %v84, %v109
    %v112 = vmul.f32 %v88, %v109
    %v113 = vmul.f32 %v92, %v109
    %v114 = vmul.f32 %v96, %v109
    %v115 = vmul.f32 %v100, %v109
    %v116 = vmul.f32 %v104, %v109
    %v117 = vadd.f32 %v71, %v110
    %v118 = vadd.f32 %v72, %v111
    %v119 = vadd.f32 %v73, %v112
    %v120 = vadd.f32 %v74, %v113
    %v121 = vadd.f32 %v75, %v114
    %v122 = vadd.f32 %v76, %v115
    %v123 = vadd.f32 %v77, %v116
    %v124 = vld [vmem:[%s2] sm:$0xff]
    %v125 = vld [vmem:[%s2 + $0x8] sm:$0xff]
    %v126 = vld [vmem:[%s2 + $0x10] sm:$0xff]
    %v127 = vld [vmem:[%s2 + $0x18] sm:$0xff]
    %v128 = vld [vmem:[%s2 + $0x20] sm:$0xff]
    %v129 = vld [vmem:[%s2 + $0x28] sm:$0xff]
    %v130 = vld [vmem:[%s2 + $0x30] sm:$0x3]
    %132 = vset.pattern.permute.xlu0 0
    %133 = vperm.xlu0 %132, %v124
    %v134 = vpop.permute.xlu0 %133
    %137 = vset.pattern.permute.xlu0 0
    %138 = vperm.xlu0 %137, %v125
    %v139 = vpop.permute.xlu0 %138
    %142 = vset.pattern.permute.xlu0 0
    %143 = vperm.xlu0 %142, %v126
    %v144 = vpop.permute.xlu0 %143
    %147 = vset.pattern.permute.xlu0 0
    %148 = vperm.xlu0 %147, %v127
    %v149 = vpop.permute.xlu0 %148
    %152 = vset.pattern.permute.xlu0 0
    %153 = vperm.xlu0 %152, %v128
    %v154 = vpop.permute.xlu0 %153
    %157 = vset.pattern.permute.xlu0 0
    %158 = vperm.xlu0 %157, %v129
    %v159 = vpop.permute.xlu0 %158
    %162 = vset.pattern.permute.xlu0 0
    %163 = vperm.xlu0 %162, %v130
    %v164 = vpop.permute.xlu0 %163
    %v166 = vadd.f32 %v117, %v134
    %v167 = vadd.f32 %v118, %v139
    %v168 = vadd.f32 %v119, %v144
    %v169 = vadd.f32 %v120, %v149
    %v170 = vadd.f32 %v121, %v154
    %v171 = vadd.f32 %v122, %v159
    %v172 = vadd.f32 %v123, %v164
    %v173 = vtanh.pop %v166
    %v174 = vtanh.pop %v167
    %v175 = vtanh.pop %v168
    %v176 = vtanh.pop %v169
    %v177 = vtanh.pop %v170
    %v178 = vtanh.pop %v171
    %v179 = vtanh.pop %v172
    %v180 = vld [vmem:[%s3] sm:$0xff]
    %v181 = vld [vmem:[%s3 + $0x8] sm:$0xff]
    %v182 = vld [vmem:[%s3 + $0x10] sm:$0xff]
    %v183 = vld [vmem:[%s3 + $0x18] sm:$0xff]
    %v184 = vld [vmem:[%s3 + $0x20] sm:$0xff]
    %v185 = vld [vmem:[%s3 + $0x28] sm:$0xff]
    %v186 = vld [vmem:[%s3 + $0x30] sm:$0x3]
    %188 = vset.pattern.permute.xlu0 0
    %189 = vperm.xlu0 %188, %v180
    %v190 = vpop.permute.xlu0 %189
    %193 = vset.pattern.permute.xlu0 0
    %194 = vperm.xlu0 %193, %v181
    %v195 = vpop.permute.xlu0 %194
    %198 = vset.pattern.permute.xlu0 0
    %199 = vperm.xlu0 %198, %v182
    %v200 = vpop.permute.xlu0 %199
    %203 = vset.pattern.permute.xlu0 0
    %204 = vperm.xlu0 %203, %v183
    %v205 = vpop.permute.xlu0 %204
    %208 = vset.pattern.permute.xlu0 0
    %209 = vperm.xlu0 %208, %v184
    %v210 = vpop.permute.xlu0 %209
    %213 = vset.pattern.permute.xlu0 0
    %214 = vperm.xlu0 %213, %v185
    %v215 = vpop.permute.xlu0 %214
    %218 = vset.pattern.permute.xlu0 0
    %219 = vperm.xlu0 %218, %v186
    %v220 = vpop.permute.xlu0 %219
    %v222 = vmul.f32 %v173, %v190
    %v223 = vmul.f32 %v174, %v195
    %v224 = vmul.f32 %v175, %v200
    %v225 = vmul.f32 %v176, %v205
    %v226 = vmul.f32 %v177, %v210
    %v227 = vmul.f32 %v178, %v215
    %v228 = vmul.f32 %v179, %v220
    %v229 = vadd.f32 %v222, %v223
    %v230 = vadd.f32 %v229, %v224
    %v231 = vadd.f32 %v230, %v225
    %v232 = vadd.f32 %v231, %v226
    %v233 = vadd.f32 %v232, %v227
    %vm234 = vcmask 1041408
    %v235 = vsel %vm234, %v228, 0.0
    %v236 = vadd.f32 %v233, %v235
    %v237 = vrot.slane %v236, 4
    %v238 = vadd.f32 %v236, %v237
    %v239 = vrot.slane %v238, 2
    %v240 = vadd.f32 %v238, %v239
    %v241 = vrot.slane %v240, 1
    %v242 = vadd.f32 %v240, %v241
    %v243 = vld [vmem:[#allocation2] sm:$0x1]
    %245 = vset.pattern.permute.xlu0 0
    %246 = vperm.xlu0 %245, %v243
    %v247 = vpop.permute.xlu0 %246
    %v249 = vlaneseq
    %v250 = vshrl.u32 %v249, 7
    %v251 = vsub.s32 0, %v250
    %v252 = vrot.slane %v247, %v251
    %v253 = vadd.f32 %v242, %v252
    %254 = vst [vmem:[#allocation3] sm:$0x1] %v24
    %255 = vst [vmem:[#allocation3 + $0x1] sm:$0x1] %v253
    // Predicated region
    $region22: #{tpu_custom_call.1} parent=1 // pred_check
      _
    $region23: #{tpu_custom_call.1} parent=1 // pred_check_branch
      %257 = sbr.rel (0) target = $region25
    $region24: #{tpu_custom_call.1} parent=1 // pred_region
      %s259 = ssub.s32 32, 32
      %260 = vsyncadd [#allocation4], %s259
      %s262 = sshll.u32 [#allocation3], 4
      %s263 = int_to_ptr.vmem [resolvable:$true] %s262
      %265 = dma.vmem_to_hbm [thread:$0]  %s263, 32, %s5, [#allocation4]
    $region25: #{tpu_custom_call.1} parent=1 // pred_fallthru
      _
    // Predicated region
    $region26: #{tpu_custom_call.1} parent=1 // pred_check
      _
    $region27: #{tpu_custom_call.1} parent=1 // pred_check_branch
      %267 = sbr.rel (0) target = $region29
    $region28: #{tpu_custom_call.1} parent=1 // pred_region
      %268 = dma.done [#allocation4], 32
    $region29: #{tpu_custom_call.1} parent=1 // pred_fallthru
      _
    %269 = vsyncpa [#allocation4], 1

</llo_original>
